<compile_context>
chip_gen: v5e
topology: v5e:2x2
jax: 0.10.0
libtpu: 0.0.40
codegen_flags: <defaults>
</compile_context>

<pallas_src>
import functools

import jax
import jax.numpy as jnp
from jax import lax
from jax.experimental import pallas as pl
from jax.experimental.pallas import tpu as pltpu

# ---- config (mirrors `args`) -------------------------------------------------
NUM_FEATURES = 32               # args.num_features -> TableEmbedding output_size (D)
OUTPUT_SIZE = 16                # args.output_size  -> linear1 out features (O)
EMB_DIM = NUM_FEATURES // 4     # per-part embedding dim / MLP hidden dim (E = H = 8)
E2 = 2 * EMB_DIM                # width of [cat_p|cat_c] and [cont_p|cont_c] halves (16)
CONT_W = 8                      # packed continuous-input width (3 + 2 -> pad to 8)
B, S = 2, 6                     # batch, cluster (sequence) length
N = B * S

# categorical vocabulary sizes: gender, korean, primary, job, rep, place, add
CAT_SIZES = (2, 2, 2, 11, 34, 19, 31)
CAT_OFFSETS = tuple(sum(CAT_SIZES[:k]) for k in range(len(CAT_SIZES)))   # row offsets
V_TOTAL = sum(CAT_SIZES)        # 101 rows in the stacked table
V_PAD = 104                     # padded to a multiple of 8 sublanes

# ---- parameter-slab row layout (one f32 [SLAB_ROWS, 128] array) --------------
R_TBL = 0                       # stacked block-diag embedding tables, cols 0:16
R_W1 = V_PAD                    # packed first MLP layer  [8,16]
R_B1 = R_W1 + 8                 # packed first-layer bias [1,16]
R_W2 = R_B1 + 8                 # block-diag second layer [16,16]
R_B2 = R_W2 + E2                # packed second-layer bias[1,16]
R_WL = R_B2 + 8                 # linear1 weight          [32,16]
R_BL = R_WL + NUM_FEATURES      # linear1 bias            [1,16]
SLAB_ROWS = ((R_BL + 1 + 7) // 8) * 8   # 184
SLAB_COLS = 128                 # lane-dense slab


def linreg_kernel(cat_ref, cont_ref, slab_ref, vlen_ref, out_ref):
    n = cat_ref.shape[0]
    o = out_ref.shape[1]
    bsz = out_ref.shape[0]
    seq = n // bsz
    f32, bf16 = jnp.float32, jnp.bfloat16

    # ---- fused categorical lookup: one multi-hot matmul against the
    #      block-diagonal stacked table (ids already offset host-side) --------
    ids = cat_ref[...]                                           # [N, 8] int32
    iota_v = lax.broadcasted_iota(jnp.int32, (n, V_PAD), 1)
    hit = ids[:, 0:1] == iota_v
    for k in range(1, 7):                                        # disjoint ranges -> OR
        hit = hit | (ids[:, k:k + 1] == iota_v)
    mh = jnp.where(hit, 1.0, 0.0).astype(bf16)                   # exact 0/1 in bf16
    tbl = slab_ref[R_TBL:R_TBL + V_PAD, 0:E2].astype(bf16)
    cat16 = jnp.dot(mh, tbl, preferred_element_type=f32)         # [N,16] = [sum5|sum2]
    # per-column mean scale (1/5 for cat_p half, 1/2 for cat_c half), applied in f32
    col = lax.broadcasted_iota(jnp.int32, (1, E2), 1)
    cat16 = cat16 * jnp.where(col < EMB_DIM, 1.0 / 5.0, 1.0 / 2.0)

    # ---- both continuous MLPs as one packed two-layer MLP -------------------
    x = cont_ref[...]                                            # [N,8] = [cont_p|cont_c|0]
    w1 = slab_ref[R_W1:R_W1 + CONT_W, 0:E2].astype(bf16)
    b1 = slab_ref[R_B1:R_B1 + 1, 0:E2]
    w2 = slab_ref[R_W2:R_W2 + E2, 0:E2].astype(bf16)
    b2 = slab_ref[R_B2:R_B2 + 1, 0:E2]
    h = jnp.dot(x.astype(bf16), w1, preferred_element_type=f32) + b1
    h = jnp.maximum(h, 0.0)                                      # ReLU
    cont16 = jnp.dot(h.astype(bf16), w2, preferred_element_type=f32) + b2   # [N,16]

    # ---- final linear fused BEFORE pooling (no lane-axis concat):
    #      y = [cat16 | cont16] @ wl  ==  cat16 @ wl[0:16] + cont16 @ wl[16:32]
    wl_cat = slab_ref[R_WL:R_WL + E2, 0:o].astype(bf16)
    wl_con = slab_ref[R_WL + E2:R_WL + NUM_FEATURES, 0:o].astype(bf16)
    bl = slab_ref[R_BL:R_BL + 1, 0:o]
    y = (jnp.dot(cat16.astype(bf16), wl_cat, preferred_element_type=f32)
         + jnp.dot(cont16.astype(bf16), wl_con, preferred_element_type=f32))   # [N,O]

    # ---- cluster mean over valid positions (masked VPU reduction),
    #      statically unrolled over the tiny batch, single final store --------
    s_ids = lax.broadcasted_iota(jnp.int32, (seq, o), 0)         # hoisted (no CSE in JAX)
    rows = []
    for b in range(bsz):
        vl = vlen_ref[b]                                         # SMEM scalar int32
        m = jnp.where(s_ids < vl, 1.0, 0.0)
        seg = y[b * seq:(b + 1) * seq, :]                        # static slice [S,O]
        rows.append(jnp.sum(seg * m, axis=0, keepdims=True)
                    * (1.0 / vl.astype(f32)))                    # [1,O]
    pooled = jnp.concatenate(rows, axis=0)                       # [B,O]
    out_ref[...] = pooled + bl


def pack_params(params):
    """Pack all 17 parameter arrays into one lane-dense f32 slab (layout only)."""
    (tg, tk, tpr, tj, tr, tpl, ta,
     w1p, b1p, w2p, b2p, w1c, b1c, w2c, b2c, wl, bl) = params
    slab = jnp.zeros((SLAB_ROWS, SLAB_COLS), jnp.float32)

    def put(s, r0, c0, a):
        return s.at[r0:r0 + a.shape[0], c0:c0 + a.shape[1]].set(a.astype(jnp.float32))

    # block-diagonal stacked embedding tables: cat_p tables -> cols 0:8,
    # cat_c tables -> cols 8:16, rows follow CAT_OFFSETS
    r = R_TBL
    for t in (tg, tk, tpr, tj, tr):
        slab = put(slab, r, 0, t); r += t.shape[0]
    for t in (tpl, ta):
        slab = put(slab, r, EMB_DIM, t); r += t.shape[0]
    # packed first MLP layer: cont_p features (packed cols 0:3) -> h_p (cols 0:8),
    # cont_c features (packed cols 3:5) -> h_c (cols 8:16); zero elsewhere
    slab = put(slab, R_W1 + 0, 0, w1p)            # (3,8)
    slab = put(slab, R_W1 + 3, EMB_DIM, w1c)      # (2,8)
    slab = put(slab, R_B1, 0, b1p)
    slab = put(slab, R_B1, EMB_DIM, b1c)
    # block-diagonal second MLP layer
    slab = put(slab, R_W2 + 0, 0, w2p)            # (8,8)
    slab = put(slab, R_W2 + EMB_DIM, EMB_DIM, w2c)
    slab = put(slab, R_B2, 0, b2p)
    slab = put(slab, R_B2, EMB_DIM, b2c)
    # linear1
    slab = put(slab, R_WL, 0, wl)                 # (32,16)
    slab = put(slab, R_BL, 0, bl)                 # (1,16)
    return slab


@functools.partial(jax.jit, static_argnames=())
def linear_regression_forward(cont_p, cont_c, cat_p, cat_c, val_len, diff_days, slab):
    del diff_days  # unused: disable_pe=True, reduction='mean'
    b, s, _ = cont_p.shape
    n = b * s
    # pack the two continuous inputs into one [N, 8] f32 array
    cont_all = jnp.zeros((n, CONT_W), jnp.float32)
    cont_all = cont_all.at[:, 0:3].set(cont_p.reshape(n, 3).astype(jnp.float32))
    cont_all = cont_all.at[:, 3:5].set(cont_c.reshape(n, 2).astype(jnp.float32))
    # offset category ids into the stacked block-diagonal table's row space
    offs = jnp.asarray(CAT_OFFSETS, jnp.int32)
    cat_all = jnp.concatenate(
        [cat_p.reshape(n, 5).astype(jnp.int32) + offs[None, :5],
         cat_c.reshape(n, 2).astype(jnp.int32) + offs[None, 5:],
         jnp.zeros((n, 1), jnp.int32)], axis=1)                    # [N,8] (last col unused)

    vmem = pl.BlockSpec(memory_space=pltpu.MemorySpace.VMEM)
    smem = pl.BlockSpec(memory_space=pltpu.MemorySpace.SMEM)
    return pl.pallas_call(
        linreg_kernel,
        out_shape=jax.ShapeDtypeStruct((b, OUTPUT_SIZE), jnp.float32),
        in_specs=[vmem, vmem, vmem, smem],
        out_specs=vmem,
    )(cat_all, cont_all, slab, val_len.reshape(b).astype(jnp.int32))


def reference(cont_p, cont_c, cat_p, cat_c, val_len, params):
    (tg, tk, tpr, tj, tr, tpl, ta,
     w1p, b1p, w2p, b2p, w1c, b1c, w2c, b2c, wl, bl) = params

    def mlp(x, w1, b1, w2, b2):
        return jnp.maximum(x @ w1 + b1, 0.0) @ w2 + b2

    cp = mlp(cont_p, w1p, b1p, w2p, b2p)
    cc = mlp(cont_c, w1c, b1c, w2c, b2c)
    a1 = tg[cat_p[..., 0]]; a2 = tk[cat_p[..., 1]]; a3 = tpr[cat_p[..., 2]]
    a4 = tj[cat_p[..., 3]]; a5 = tr[cat_p[..., 4]]
    a6 = tpl[cat_c[..., 0]]; a7 = ta[cat_c[..., 1]]
    catp = (a1 + a2 + a3 + a4 + a5) / 5.0
    catc = (a6 + a7) / 2.0
    x = jnp.concatenate([catp, catc, cp, cc], axis=-1)             # [B, S, D]
    mask = (jnp.arange(x.shape[1])[None, :] < val_len[:, None]).astype(jnp.float32)
    pooled = (x * mask[..., None]).sum(1) / val_len[:, None].astype(jnp.float32)
    return pooled @ wl + bl


if __name__ == "__main__":
    key = jax.random.PRNGKey(0)
    ks = jax.random.split(key, 26)
    E, H, D, O = EMB_DIM, EMB_DIM, NUM_FEATURES, OUTPUT_SIZE
    nrm = lambda k, shp: 0.1 * jax.random.normal(k, shp, jnp.float32)

    params = (
        # embedding tables
        nrm(ks[0], (2, E)),   # gender
        nrm(ks[1], (2, E)),   # korean
        nrm(ks[2], (2, E)),   # primary
        nrm(ks[3], (11, E)),  # job
        nrm(ks[4], (34, E)),  # rep
        nrm(ks[5], (19, E)),  # place
        nrm(ks[6], (31, E)),  # add
        # cont_p_NN: Linear(3,H) -> ReLU -> Linear(H,H)
        nrm(ks[7], (3, H)), nrm(ks[8], (1, H)), nrm(ks[9], (H, H)), nrm(ks[10], (1, H)),
        # cont_c_NN: Linear(2,H) -> ReLU -> Linear(H,H)   (use_treatment=False)
        nrm(ks[11], (2, H)), nrm(ks[12], (1, H)), nrm(ks[13], (H, H)), nrm(ks[14], (1, H)),
        # linear1: Linear(D, O)
        nrm(ks[15], (D, O)), nrm(ks[16], (1, O)),
    )

    cont_p = jax.random.normal(ks[17], (B, S, 3), jnp.float32)
    cont_c = jax.random.normal(ks[18], (B, S, 2), jnp.float32)
    cat_p = jnp.stack([
        jax.random.randint(ks[19], (B, S), 0, 2),
        jax.random.randint(ks[20], (B, S), 0, 2),
        jax.random.randint(ks[21], (B, S), 0, 2),
        jax.random.randint(ks[22], (B, S), 0, 11),
        jax.random.randint(ks[23], (B, S), 0, 34),
    ], axis=-1).astype(jnp.int32)
    cat_c = jnp.stack([
        jax.random.randint(ks[24], (B, S), 0, 19),
        jax.random.randint(ks[25], (B, S), 0, 31),
    ], axis=-1).astype(jnp.int32)
    val_len = jnp.array([4, 6], jnp.int32)
    diff_days = jnp.zeros((B, S, 1), jnp.float32)

    slab = jax.block_until_ready(pack_params(params))   # one-time host-side packing

    out = jax.block_until_ready(
        linear_regression_forward(cont_p, cont_c, cat_p, cat_c, val_len, diff_days, slab))
    ref = reference(cont_p, cont_c, cat_p, cat_c, val_len, params)

    assert out.shape == (B, OUTPUT_SIZE), out.shape
    assert jnp.allclose(out, ref, rtol=1e-2, atol=1e-2), (out, ref)
    print("KERNEL_OK")
</pallas_src>

<mosaic_0001>
module attributes {stable_mosaic.version = 11 : i64} {
  func.func @linreg_kernel(%arg0: memref<12x8xi32, #tpu.memory_space<vmem>>, %arg1: memref<12x8xf32, #tpu.memory_space<vmem>>, %arg2: memref<184x128xf32, #tpu.memory_space<vmem>>, %arg3: memref<2xi32, #tpu.memory_space<smem>>, %arg4: memref<2x16xf32, #tpu.memory_space<vmem>>) attributes {dimension_semantics = [], scalar_prefetch = 0 : i64, scratch_operands = 0 : i64, tpu.core_type = #tpu.core_type<tc>} {
    %c0 = arith.constant 0 : index
    %c0_0 = arith.constant 0 : index
    %0 = vector.load %arg0[%c0, %c0_0] : memref<12x8xi32, #tpu.memory_space<vmem>>, vector<12x8xi32>
    %1 = tpu.iota {dimensions = array<i32: 1>} : vector<12x104xi32>
    %2 = vector.extract_strided_slice %0 {offsets = [0, 0], sizes = [12, 1], strides = [1, 1]} : vector<12x8xi32> to vector<12x1xi32>
    %3 = vector.broadcast %2 : vector<12x1xi32> to vector<12x104xi32>
    %4 = arith.cmpi eq, %3, %1 : vector<12x104xi32>
    %5 = vector.extract_strided_slice %0 {offsets = [0, 1], sizes = [12, 1], strides = [1, 1]} : vector<12x8xi32> to vector<12x1xi32>
    %6 = vector.broadcast %5 : vector<12x1xi32> to vector<12x104xi32>
    %7 = arith.cmpi eq, %6, %1 : vector<12x104xi32>
    %8 = arith.ori %4, %7 : vector<12x104xi1>
    %9 = vector.extract_strided_slice %0 {offsets = [0, 2], sizes = [12, 1], strides = [1, 1]} : vector<12x8xi32> to vector<12x1xi32>
    %10 = vector.broadcast %9 : vector<12x1xi32> to vector<12x104xi32>
    %11 = arith.cmpi eq, %10, %1 : vector<12x104xi32>
    %12 = arith.ori %8, %11 : vector<12x104xi1>
    %13 = vector.extract_strided_slice %0 {offsets = [0, 3], sizes = [12, 1], strides = [1, 1]} : vector<12x8xi32> to vector<12x1xi32>
    %14 = vector.broadcast %13 : vector<12x1xi32> to vector<12x104xi32>
    %15 = arith.cmpi eq, %14, %1 : vector<12x104xi32>
    %16 = arith.ori %12, %15 : vector<12x104xi1>
    %17 = vector.extract_strided_slice %0 {offsets = [0, 4], sizes = [12, 1], strides = [1, 1]} : vector<12x8xi32> to vector<12x1xi32>
    %18 = vector.broadcast %17 : vector<12x1xi32> to vector<12x104xi32>
    %19 = arith.cmpi eq, %18, %1 : vector<12x104xi32>
    %20 = arith.ori %16, %19 : vector<12x104xi1>
    %21 = vector.extract_strided_slice %0 {offsets = [0, 5], sizes = [12, 1], strides = [1, 1]} : vector<12x8xi32> to vector<12x1xi32>
    %22 = vector.broadcast %21 : vector<12x1xi32> to vector<12x104xi32>
    %23 = arith.cmpi eq, %22, %1 : vector<12x104xi32>
    %24 = arith.ori %20, %23 : vector<12x104xi1>
    %25 = vector.extract_strided_slice %0 {offsets = [0, 6], sizes = [12, 1], strides = [1, 1]} : vector<12x8xi32> to vector<12x1xi32>
    %26 = vector.broadcast %25 : vector<12x1xi32> to vector<12x104xi32>
    %27 = arith.cmpi eq, %26, %1 : vector<12x104xi32>
    %28 = arith.ori %24, %27 : vector<12x104xi1>
    %cst = arith.constant 1.000000e+00 : f32
    %cst_1 = arith.constant 0.000000e+00 : f32
    %29 = vector.broadcast %cst : f32 to vector<12x104xf32>
    %30 = vector.broadcast %cst_1 : f32 to vector<12x104xf32>
    %31 = arith.select %28, %29, %30 : vector<12x104xi1>, vector<12x104xf32>
    %32 = arith.truncf %31 : vector<12x104xf32> to vector<12x104xbf16>
    %c0_2 = arith.constant 0 : index
    %c0_3 = arith.constant 0 : index
    %33 = vector.load %arg2[%c0_2, %c0_3] : memref<184x128xf32, #tpu.memory_space<vmem>>, vector<104x16xf32>
    %34 = arith.truncf %33 : vector<104x16xf32> to vector<104x16xbf16>
    %cst_4 = arith.constant dense<0.000000e+00> : vector<12x16xf32>
    %35 = tpu.matmul %32, %34, %cst_4 {dimension_numbers = #tpu.dot_dimension_numbers<[1], [0], [0], [1], [0, 0, 1, 1], [], []>} : vector<12x104xbf16>, vector<104x16xbf16>, vector<12x16xf32> -> vector<12x16xf32>
    %36 = tpu.iota {dimensions = array<i32: 1>} : vector<1x16xi32>
    %c8_i32 = arith.constant 8 : i32
    %37 = vector.broadcast %c8_i32 : i32 to vector<1x16xi32>
    %38 = arith.cmpi slt, %36, %37 : vector<1x16xi32>
    %cst_5 = arith.constant 2.000000e-01 : f32
    %cst_6 = arith.constant 5.000000e-01 : f32
    %39 = vector.broadcast %cst_5 : f32 to vector<1x16xf32>
    %40 = vector.broadcast %cst_6 : f32 to vector<1x16xf32>
    %41 = arith.select %38, %39, %40 : vector<1x16xi1>, vector<1x16xf32>
    %42 = vector.broadcast %41 : vector<1x16xf32> to vector<12x16xf32>
    %43 = arith.mulf %35, %42 : vector<12x16xf32>
    %c0_7 = arith.constant 0 : index
    %c0_8 = arith.constant 0 : index
    %44 = vector.load %arg1[%c0_7, %c0_8] : memref<12x8xf32, #tpu.memory_space<vmem>>, vector<12x8xf32>
    %c104 = arith.constant 104 : index
    %c0_9 = arith.constant 0 : index
    %45 = vector.load %arg2[%c104, %c0_9] : memref<184x128xf32, #tpu.memory_space<vmem>>, vector<8x16xf32>
    %46 = arith.truncf %45 : vector<8x16xf32> to vector<8x16xbf16>
    %c112 = arith.constant 112 : index
    %c0_10 = arith.constant 0 : index
    %47 = vector.load %arg2[%c112, %c0_10] : memref<184x128xf32, #tpu.memory_space<vmem>>, vector<1x16xf32>
    %c120 = arith.constant 120 : index
    %c0_11 = arith.constant 0 : index
    %48 = vector.load %arg2[%c120, %c0_11] : memref<184x128xf32, #tpu.memory_space<vmem>>, vector<16x16xf32>
    %49 = arith.truncf %48 : vector<16x16xf32> to vector<16x16xbf16>
    %c136 = arith.constant 136 : index
    %c0_12 = arith.constant 0 : index
    %50 = vector.load %arg2[%c136, %c0_12] : memref<184x128xf32, #tpu.memory_space<vmem>>, vector<1x16xf32>
    %51 = arith.truncf %44 : vector<12x8xf32> to vector<12x8xbf16>
    %cst_13 = arith.constant dense<0.000000e+00> : vector<12x16xf32>
    %52 = tpu.matmul %51, %46, %cst_13 {dimension_numbers = #tpu.dot_dimension_numbers<[1], [0], [0], [1], [0, 0, 1, 1], [], []>} : vector<12x8xbf16>, vector<8x16xbf16>, vector<12x16xf32> -> vector<12x16xf32>
    %53 = vector.broadcast %47 : vector<1x16xf32> to vector<12x16xf32>
    %54 = arith.addf %52, %53 : vector<12x16xf32>
    %cst_14 = arith.constant 0.000000e+00 : f32
    %55 = vector.broadcast %cst_14 : f32 to vector<12x16xf32>
    %56 = arith.maximumf %54, %55 : vector<12x16xf32>
    %57 = arith.truncf %56 : vector<12x16xf32> to vector<12x16xbf16>
    %cst_15 = arith.constant dense<0.000000e+00> : vector<12x16xf32>
    %58 = tpu.matmul %57, %49, %cst_15 {dimension_numbers = #tpu.dot_dimension_numbers<[1], [0], [0], [1], [0, 0, 1, 1], [], []>} : vector<12x16xbf16>, vector<16x16xbf16>, vector<12x16xf32> -> vector<12x16xf32>
    %59 = vector.broadcast %50 : vector<1x16xf32> to vector<12x16xf32>
    %60 = arith.addf %58, %59 : vector<12x16xf32>
    %c144 = arith.constant 144 : index
    %c0_16 = arith.constant 0 : index
    %61 = vector.load %arg2[%c144, %c0_16] : memref<184x128xf32, #tpu.memory_space<vmem>>, vector<16x16xf32>
    %62 = arith.truncf %61 : vector<16x16xf32> to vector<16x16xbf16>
    %c160 = arith.constant 160 : index
    %c0_17 = arith.constant 0 : index
    %63 = vector.load %arg2[%c160, %c0_17] : memref<184x128xf32, #tpu.memory_space<vmem>>, vector<16x16xf32>
    %64 = arith.truncf %63 : vector<16x16xf32> to vector<16x16xbf16>
    %c176 = arith.constant 176 : index
    %c0_18 = arith.constant 0 : index
    %65 = vector.load %arg2[%c176, %c0_18] : memref<184x128xf32, #tpu.memory_space<vmem>>, vector<1x16xf32>
    %66 = arith.truncf %43 : vector<12x16xf32> to vector<12x16xbf16>
    %cst_19 = arith.constant dense<0.000000e+00> : vector<12x16xf32>
    %67 = tpu.matmul %66, %62, %cst_19 {dimension_numbers = #tpu.dot_dimension_numbers<[1], [0], [0], [1], [0, 0, 1, 1], [], []>} : vector<12x16xbf16>, vector<16x16xbf16>, vector<12x16xf32> -> vector<12x16xf32>
    %68 = arith.truncf %60 : vector<12x16xf32> to vector<12x16xbf16>
    %cst_20 = arith.constant dense<0.000000e+00> : vector<12x16xf32>
    %69 = tpu.matmul %68, %64, %cst_20 {dimension_numbers = #tpu.dot_dimension_numbers<[1], [0], [0], [1], [0, 0, 1, 1], [], []>} : vector<12x16xbf16>, vector<16x16xbf16>, vector<12x16xf32> -> vector<12x16xf32>
    %70 = arith.addf %67, %69 : vector<12x16xf32>
    %71 = tpu.iota {dimensions = array<i32: 0>} : vector<6x16xi32>
    %c0_21 = arith.constant 0 : index
    %72 = memref.load %arg3[%c0_21] : memref<2xi32, #tpu.memory_space<smem>>
    %73 = vector.broadcast %72 : i32 to vector<6x16xi32>
    %74 = arith.cmpi slt, %71, %73 : vector<6x16xi32>
    %cst_22 = arith.constant 1.000000e+00 : f32
    %cst_23 = arith.constant 0.000000e+00 : f32
    %75 = vector.broadcast %cst_22 : f32 to vector<6x16xf32>
    %76 = vector.broadcast %cst_23 : f32 to vector<6x16xf32>
    %77 = arith.select %74, %75, %76 : vector<6x16xi1>, vector<6x16xf32>
    %78 = vector.extract_strided_slice %70 {offsets = [0, 0], sizes = [6, 16], strides = [1, 1]} : vector<12x16xf32> to vector<6x16xf32>
    %79 = arith.mulf %78, %77 : vector<6x16xf32>
    %cst_24 = arith.constant dense<0.000000e+00> : vector<16xf32>
    %80 = vector.multi_reduction <add>, %79, %cst_24 [0] : vector<6x16xf32> to vector<16xf32>
    %81 = vector.shape_cast %80 : vector<16xf32> to vector<1x16xf32>
    %82 = arith.sitofp %72 : i32 to f32
    %cst_25 = arith.constant 1.000000e+00 : f32
    %83 = arith.divf %cst_25, %82 : f32
    %84 = vector.broadcast %83 : f32 to vector<1x16xf32>
    %85 = arith.mulf %81, %84 : vector<1x16xf32>
    %c1 = arith.constant 1 : index
    %86 = memref.load %arg3[%c1] : memref<2xi32, #tpu.memory_space<smem>>
    %87 = vector.broadcast %86 : i32 to vector<6x16xi32>
    %88 = arith.cmpi slt, %71, %87 : vector<6x16xi32>
    %cst_26 = arith.constant 1.000000e+00 : f32
    %cst_27 = arith.constant 0.000000e+00 : f32
    %89 = vector.broadcast %cst_26 : f32 to vector<6x16xf32>
    %90 = vector.broadcast %cst_27 : f32 to vector<6x16xf32>
    %91 = arith.select %88, %89, %90 : vector<6x16xi1>, vector<6x16xf32>
    %92 = vector.extract_strided_slice %70 {offsets = [6, 0], sizes = [6, 16], strides = [1, 1]} : vector<12x16xf32> to vector<6x16xf32>
    %93 = arith.mulf %92, %91 : vector<6x16xf32>
    %cst_28 = arith.constant dense<0.000000e+00> : vector<16xf32>
    %94 = vector.multi_reduction <add>, %93, %cst_28 [0] : vector<6x16xf32> to vector<16xf32>
    %95 = vector.shape_cast %94 : vector<16xf32> to vector<1x16xf32>
    %96 = arith.sitofp %86 : i32 to f32
    %cst_29 = arith.constant 1.000000e+00 : f32
    %97 = arith.divf %cst_29, %96 : f32
    %98 = vector.broadcast %97 : f32 to vector<1x16xf32>
    %99 = arith.mulf %95, %98 : vector<1x16xf32>
    %100 = tpu.concatenate %85, %99 in 0 : vector<1x16xf32>, vector<1x16xf32> -> vector<2x16xf32>
    %101 = vector.broadcast %65 : vector<1x16xf32> to vector<2x16xf32>
    %102 = arith.addf %100, %101 : vector<2x16xf32>
    %c0_30 = arith.constant 0 : index
    %c0_31 = arith.constant 0 : index
    %103 = vector.load %arg4[%c0_30, %c0_31] : memref<2x16xf32, #tpu.memory_space<vmem>>, vector<2x16xf32>
    tpu.vector_store %arg4[%c0_30, %c0_31], %102 {strides = array<i32>} : memref<2x16xf32, #tpu.memory_space<vmem>>, vector<2x16xf32>,
    return
  }
}

</mosaic_0001>

<llo_original>
// kernel: linear_regression_forward.1
$region0: #{linear_regression_forward.1}
  #allocation0 [shape = 'u32[]', space=smem, size = 0x4, offset = 0x4, fixed_abs, tag = 'smem constant byte address 0x4 - core index']
  #allocation1 [shape = 'u32[72,128]{1,0:T(1,128)}', space=vmem, size = 0x9000, scoped, tag = 'internal scratch']
  %s0 = inlined_call_operand.vmem [shape: s32[12,8], index: 0, kind: input, shape index: {}]
  %s1 = inlined_call_operand.vmem [shape: f32[12,8], index: 1, kind: input, shape index: {}]
  %s2 = inlined_call_operand.hbm [shape: f32[184,128], index: 2, kind: input, shape index: {}]
  %s3 = inlined_call_operand.vmem [shape: s32[2], index: 3, kind: input, shape index: {}]
  %s4 = inlined_call_operand.hbm [shape: f32[2,16], index: 4, kind: output, shape index: {}]
  %s5 = sld [smem:[#allocation0]]
  $region34: #{linear_regression_forward.1} parent=0
    _
  %s7 = ssub.s32 1, %s5
  %s8 = scalar_select 0, %s7, %s5
  $region1: #{linear_regression_forward.1} parent=0
    #allocation2 [shape = 'u8[94208]{0}', space=vmem, size = 0x17000, scoped, tag = 'input window, operand 2, single buffered']
    #allocation3 [shape = 's32[1]{0}', space=sflag, size = 0x4, scoped, tag = 'scoped memory for linear_regression_forward.1']
    #allocation4 [shape = 's32[1]{0}', space=sflag, size = 0x4, scoped, tag = 'scoped memory for linear_regression_forward.1']
    #allocation5 [shape = 's32[1]{0}', space=sflag, size = 0x4, scoped, tag = 'scoped memory for linear_regression_forward.1']
    #allocation6 [shape = 'u8[512]{0}', space=smem, size = 0x200, scoped, tag = 'input window, operand 3, single buffered']
    #allocation7 [shape = 'u8[1024]{0}', space=vmem, size = 0x400, scoped, tag = 'output window, operand 0, single buffered']
    %9 = vsyncpa [#allocation3], 0
    %10 = vsyncpa [#allocation5], 0
    %11 = vsyncpa [#allocation4], 0
    // Predicated region
    $region2: #{linear_regression_forward.1} parent=1 // pred_check
      _
    $region3: #{linear_regression_forward.1} parent=1 // pred_check_branch
      %13 = sbr.rel (0) target = $region5
    $region4: #{linear_regression_forward.1} parent=1 // pred_region
      _
    $region5: #{linear_regression_forward.1} parent=1 // pred_fallthru
      _
    // Predicated region
    $region6: #{linear_regression_forward.1} parent=1 // pred_check
      _
    $region7: #{linear_regression_forward.1} parent=1 // pred_check_branch
      %15 = sbr.rel (0) target = $region9
    $region8: #{linear_regression_forward.1} parent=1 // pred_region
      _
    $region9: #{linear_regression_forward.1} parent=1 // pred_fallthru
      _
    // Predicated region
    $region10: #{linear_regression_forward.1} parent=1 // pred_check
      _
    $region11: #{linear_regression_forward.1} parent=1 // pred_check_branch
      %17 = sbr.rel (0) target = $region13
    $region12: #{linear_regression_forward.1} parent=1 // pred_region
      %19 = vsyncadd [#allocation3], 0
      %s20 = sshll.u32 %s2, 4
      %s21 = int_to_ptr.hbm [resolvable:$true] %s20
      %s22 = sshll.u32 [#allocation2], 4
      %s23 = int_to_ptr.vmem [resolvable:$true] %s22
      %28 = dma.hbm_to_vmem [thread:$0]  %s21, 2944, %s23, [#allocation3], 128, 128, 8
    $region13: #{linear_regression_forward.1} parent=1 // pred_fallthru
      _
    // Predicated region
    $region14: #{linear_regression_forward.1} parent=1 // pred_check
      _
    $region15: #{linear_regression_forward.1} parent=1 // pred_check_branch
      %30 = sbr.rel (0) target = $region17
    $region16: #{linear_regression_forward.1} parent=1 // pred_region
      %32 = vsyncadd [#allocation5], 0
      %s34 = sshll.u32 %s3, 4
      %s35 = int_to_ptr.vmem [resolvable:$true] %s34
      %37 = dma.vmem_to_smem %s35, 16, [#allocation6], [#allocation5]
    $region17: #{linear_regression_forward.1} parent=1 // pred_fallthru
      _
    // Predicated region
    $region18: #{linear_regression_forward.1} parent=1 // pred_check
      _
    $region19: #{linear_regression_forward.1} parent=1 // pred_check_branch
      %39 = sbr.rel (0) target = $region21
    $region20: #{linear_regression_forward.1} parent=1 // pred_region
      %41 = dma.done [#allocation3], 2944
    $region21: #{linear_regression_forward.1} parent=1 // pred_fallthru
      _
    // Predicated region
    $region22: #{linear_regression_forward.1} parent=1 // pred_check
      _
    $region23: #{linear_regression_forward.1} parent=1 // pred_check_branch
      %43 = sbr.rel (0) target = $region25
    $region24: #{linear_regression_forward.1} parent=1 // pred_region
      %45 = dma.done [#allocation5], 16
    $region25: #{linear_regression_forward.1} parent=1 // pred_fallthru
      _
    %46 = sfence
    %v48 = vld [vmem:[%s0] sm:$0xff]
    %v49 = vld [vmem:[%s0 + $0x8] sm:$0xf]
    %v50 = vlaneseq
    %v51 = vand.u32 %v50, 127
    %52 = vset.pattern.permute.xlu0 0
    %53 = vperm.xlu0 %52, %v48
    %v54 = vpop.permute.xlu0 %53
    %55 = vset.pattern.permute.xlu0 0
    %56 = vperm.xlu0 %55, %v49
    %v57 = vpop.permute.xlu0 %56
    %vm58 = vcmp.eq.s32.totalorder %v54, %v51
    %vm59 = vcmp.eq.s32.totalorder %v57, %v51
    %60 = vset.pattern.permute.xlu0 1
    %61 = vperm.xlu0 %60, %v48
    %v62 = vpop.permute.xlu0 %61
    %63 = vset.pattern.permute.xlu0 1
    %64 = vperm.xlu0 %63, %v49
    %v65 = vpop.permute.xlu0 %64
    %vm66 = vcmp.eq.s32.totalorder %v62, %v51
    %vm67 = vcmp.eq.s32.totalorder %v65, %v51
    %vm68 = vmor %vm58, %vm66
    %vm69 = vmor %vm59, %vm67
    %70 = vset.pattern.permute.xlu0 2
    %71 = vperm.xlu0 %70, %v48
    %v72 = vpop.permute.xlu0 %71
    %73 = vset.pattern.permute.xlu0 2
    %74 = vperm.xlu0 %73, %v49
    %v75 = vpop.permute.xlu0 %74
    %vm76 = vcmp.eq.s32.totalorder %v72, %v51
    %vm77 = vcmp.eq.s32.totalorder %v75, %v51
    %vm78 = vmor %vm68, %vm76
    %vm79 = vmor %vm69, %vm77
    %80 = vset.pattern.permute.xlu0 3
    %81 = vperm.xlu0 %80, %v48
    %v82 = vpop.permute.xlu0 %81
    %83 = vset.pattern.permute.xlu0 3
    %84 = vperm.xlu0 %83, %v49
    %v85 = vpop.permute.xlu0 %84
    %vm86 = vcmp.eq.s32.totalorder %v82, %v51
    %vm87 = vcmp.eq.s32.totalorder %v85, %v51
    %vm88 = vmor %vm78, %vm86
    %vm89 = vmor %vm79, %vm87
    %90 = vset.pattern.permute.xlu0 4
    %91 = vperm.xlu0 %90, %v48
    %v92 = vpop.permute.xlu0 %91
    %93 = vset.pattern.permute.xlu0 4
    %94 = vperm.xlu0 %93, %v49
    %v95 = vpop.permute.xlu0 %94
    %vm96 = vcmp.eq.s32.totalorder %v92, %v51
    %vm97 = vcmp.eq.s32.totalorder %v95, %v51
    %vm98 = vmor %vm88, %vm96
    %vm99 = vmor %vm89, %vm97
    %100 = vset.pattern.permute.xlu0 5
    %101 = vperm.xlu0 %100, %v48
    %v102 = vpop.permute.xlu0 %101
    %103 = vset.pattern.permute.xlu0 5
    %104 = vperm.xlu0 %103, %v49
    %v105 = vpop.permute.xlu0 %104
    %vm106 = vcmp.eq.s32.totalorder %v102, %v51
    %vm107 = vcmp.eq.s32.totalorder %v105, %v51
    %vm108 = vmor %vm98, %vm106
    %vm109 = vmor %vm99, %vm107
    %110 = vset.pattern.permute.xlu0 6
    %111 = vperm.xlu0 %110, %v48
    %v112 = vpop.permute.xlu0 %111
    %113 = vset.pattern.permute.xlu0 6
    %114 = vperm.xlu0 %113, %v49
    %v115 = vpop.permute.xlu0 %114
    %vm116 = vcmp.eq.s32.totalorder %v112, %v51
    %vm117 = vcmp.eq.s32.totalorder %v115, %v51
    %vm118 = vmor %vm108, %vm116
    %vm119 = vmor %vm109, %vm117
    %v120 = vsel %vm118, 1.0, 0.0
    %v121 = vsel %vm119, 1.0, 0.0
    %v122 = vpack.c.bf16 %v121, %v120
    %v123 = vld [vmem:[#allocation2] sm:$0xff]
    %v124 = vld [vmem:[#allocation2 + $0x8] sm:$0xff]
    %v125 = vld [vmem:[#allocation2 + $0x10] sm:$0xff]
    %v126 = vld [vmem:[#allocation2 + $0x18] sm:$0xff]
    %v127 = vld [vmem:[#allocation2 + $0x20] sm:$0xff]
    %v128 = vld [vmem:[#allocation2 + $0x28] sm:$0xff]
    %v129 = vld [vmem:[#allocation2 + $0x30] sm:$0xff]
    %v130 = vld [vmem:[#allocation2 + $0x38] sm:$0xff]
    %v131 = vld [vmem:[#allocation2 + $0x40] sm:$0xff]
    %v132 = vld [vmem:[#allocation2 + $0x48] sm:$0xff]
    %v133 = vld [vmem:[#allocation2 + $0x50] sm:$0xff]
    %v134 = vld [vmem:[#allocation2 + $0x58] sm:$0xff]
    %v135 = vld [vmem:[#allocation2 + $0x60] sm:$0xff]
    %v136 = vpack.c.bf16 %v124, %v123
    %v137 = vpack.c.bf16 %v126, %v125
    %v138 = vpack.c.bf16 %v128, %v127
    %v139 = vpack.c.bf16 %v130, %v129
    %v140 = vpack.c.bf16 %v132, %v131
    %v141 = vpack.c.bf16 %v134, %v133
    %v142 = vpack.c.bf16 %v135, %v135
    %vm143 = vcmask 850944
    %v145 = vsel %vm143, %v122, 0
    %vm147 = vcmask 1043456
    %v149 = vsel %vm147, %v142, 0
    %151 = vmatpush.bf16.msra.mxu0 0
    %152 = vmatpush.bf16.msra.mxu0 %v149
    %153 = vmatpush.bf16.msra.mxu0 %v141
    %154 = vmatpush.bf16.msra.mxu0 %v140
    %155 = vmatpush.bf16.msra.mxu0 %v139
    %156 = vmatpush.bf16.msra.mxu0 %v138
    %157 = vmatpush.bf16.msra.mxu0 %v137
    %158 = vmatpush.bf16.msra.mxu0 %v136
    %159 = vmatmul.bf16.gmra.mxu0 %v145
    %v160 = vpop.f32.mrf.mxu0
    %v161 = vadd.f32 0.0, %v160
    %v162 = vpop.f32.mrf.mxu0
    %v163 = vadd.f32 0.0, %v162
    %164 = vdwg.mxu0
    %vm165 = vcmp.lt.s32.totalorder %v51, 8
    %v166 = vsel %vm165, 0.2, 0.5
    %v167 = vmul.f32 %v161, %v166
    %v168 = vmul.f32 %v163, %v166
    %v169 = vld [vmem:[%s1] sm:$0xff]
    %v170 = vld [vmem:[%s1 + $0x8] sm:$0xf]
    %v171 = vld [vmem:[#allocation2 + $0x68] sm:$0xff]
    %v172 = vpack.c.bf16 %v171, %v171
    %v173 = vld [vmem:[#allocation2 + $0x70] sm:$0x1]
    %v174 = vld [vmem:[#allocation2 + $0x78] sm:$0xff]
    %v175 = vld [vmem:[#allocation2 + $0x80] sm:$0xff]
    %v176 = vpack.c.bf16 %v175, %v174
    %v177 = vld [vmem:[#allocation2 + $0x88] sm:$0x1]
    %v178 = vpack.c.bf16 %v170, %v169
    %v179 = vperm.slane %v173, 0
    %vm180 = vcmask 64512
    %v182 = vsel %vm180, %v178, 0
    %v185 = vsel %vm147, %v172, 0
    %187 = vmatpush.bf16.msra.mxu0 0
    %188 = vmatpush.bf16.msra.mxu0 0
    %189 = vmatpush.bf16.msra.mxu0 0
    %190 = vmatpush.bf16.msra.mxu0 0
    %191 = vmatpush.bf16.msra.mxu0 0
    %192 = vmatpush.bf16.msra.mxu0 0
    %193 = vmatpush.bf16.msra.mxu0 0
    %194 = vmatpush.bf16.msra.mxu0 %v185
    %195 = vmatmul.bf16.gmra.mxu0 %v182
    %v196 = vpop.f32.mrf.mxu0
    %v197 = vadd.f32 %v179, %v196
    %v198 = vpop.f32.mrf.mxu0
    %v199 = vadd.f32 %v179, %v198
    %200 = vdwg.mxu0
    %v201 = vmax.f32 %v197, 0.0
    %v202 = vmax.f32 %v199, 0.0
    %v203 = vpack.c.bf16 %v202, %v201
    %v204 = vperm.slane %v177, 0
    %vm205 = vcmask 130048
    %v207 = vsel %vm205, %v203, 0
    %209 = vmatpush.bf16.msra.mxu0 0
    %210 = vmatpush.bf16.msra.mxu0 0
    %211 = vmatpush.bf16.msra.mxu0 0
    %212 = vmatpush.bf16.msra.mxu0 0
    %213 = vmatpush.bf16.msra.mxu0 0
    %214 = vmatpush.bf16.msra.mxu0 0
    %215 = vmatpush.bf16.msra.mxu0 0
    %216 = vmatpush.bf16.msra.mxu0 %v176
    %217 = vmatmul.bf16.gmra.mxu0 %v207
    %v218 = vpop.f32.mrf.mxu0
    %v219 = vadd.f32 %v204, %v218
    %v220 = vpop.f32.mrf.mxu0
    %v221 = vadd.f32 %v204, %v220
    %222 = vdwg.mxu0
    %v223 = vld [vmem:[#allocation2 + $0x90] sm:$0xff]
    %v224 = vld [vmem:[#allocation2 + $0x98] sm:$0xff]
    %v225 = vpack.c.bf16 %v224, %v223
    %v226 = vld [vmem:[#allocation2 + $0xa0] sm:$0xff]
    %v227 = vld [vmem:[#allocation2 + $0xa8] sm:$0xff]
    %v228 = vpack.c.bf16 %v227, %v226
    %v229 = vld [vmem:[#allocation2 + $0xb0] sm:$0x1]
    %v230 = vpack.c.bf16 %v168, %v167
    %v231 = vpack.c.bf16 %v221, %v219
    %v233 = vsel %vm205, %v231, 0
    %235 = vmatpush.bf16.msra.mxu0 0
    %236 = vmatpush.bf16.msra.mxu0 0
    %237 = vmatpush.bf16.msra.mxu0 0
    %238 = vmatpush.bf16.msra.mxu0 0
    %239 = vmatpush.bf16.msra.mxu0 0
    %240 = vmatpush.bf16.msra.mxu0 0
    %241 = vmatpush.bf16.msra.mxu0 0
    %242 = vmatpush.bf16.msra.mxu0 %v228
    %243 = vmatmul.bf16.gmra.mxu0 %v233
    %v244 = vpop.f32.mrf.mxu0
    %v245 = vadd.f32 0.0, %v244
    %v246 = vpop.f32.mrf.mxu0
    %v247 = vadd.f32 0.0, %v246
    %248 = vdwg.mxu0
    %v250 = vsel %vm205, %v230, 0
    %252 = vmatpush.bf16.msra.mxu0 0
    %253 = vmatpush.bf16.msra.mxu0 0
    %254 = vmatpush.bf16.msra.mxu0 0
    %255 = vmatpush.bf16.msra.mxu0 0
    %256 = vmatpush.bf16.msra.mxu0 0
    %257 = vmatpush.bf16.msra.mxu0 0
    %258 = vmatpush.bf16.msra.mxu0 0
    %259 = vmatpush.bf16.msra.mxu0 %v225
    %260 = vmatmul.bf16.gmra.mxu0 %v250
    %v261 = vpop.f32.mrf.mxu0
    %v262 = vadd.f32 %v245, %v261
    %v263 = vpop.f32.mrf.mxu0
    %v264 = vadd.f32 %v247, %v263
    %265 = vdwg.mxu0
    %v266 = vlaneseq
    %v267 = vshrl.u32 %v266, 7
    %s268 = sld [smem:[#allocation6]]
    %v269 = vstv %s268
    %vm270 = vcmp.lt.s32.totalorder %v267, %v269
    %v271 = vsel %vm270, 1.0, 0.0
    %v272 = vmul.f32 %v262, %v271
    %vm273 = vcmask 128000
    %v274 = vsel %vm273, %v272, 0.0
    %v275 = vrot.slane %v274, 4
    %v276 = vadd.f32 %v274, %v275
    %v277 = vrot.slane %v276, 2
    %v278 = vadd.f32 %v276, %v277
    %v279 = vrot.slane %v278, 1
    %v280 = vadd.f32 %v278, %v279
    %s281 = scvt.s32.f32 %s268
    %v282 = vstv %s281
    %v283 = vrcp.pop %v282
    %v284 = vmul.f32 %v282, %v283
    %v285 = vsub.f32 1.0, %v284
    %v286 = vmul.f32 %v283, %v285
    %v287 = vadd.f32 %v283, %v286
    %vm288 = vweird.f32 %v282
    %vm289 = vweird.f32 %v283
    %vm290 = vmor %vm288, %vm289
    %v291 = vsel %vm290, %v283, %v287
    %v292 = vand.u32 2147483647, %v282
    %vm293 = vcmp.eq.f32.partialorder %v292, 8.507059e+37
    %v294 = vand.u32 %v282, 2147483648
    %v295 = vor.u32 1.1754944e-38, %v294
    %v296 = vsel %vm293, %v295, %v291
    %s297 = vtos %v296
    %v298 = vstv %s297
    %v299 = vmul.f32 %v280, %v298
    %s300 = sld [smem:[#allocation6 + $0x1]]
    %v301 = vstv %s300
    %vm302 = vcmp.lt.s32.totalorder %v267, %v301
    %v303 = vsel %vm302, 1.0, 0.0
    %v305 = vrot.slane %v303, 2
    %v307 = vmul.f32 %v262, %v305
    %v308 = vmul.f32 %v264, %v305
    %vm311 = vcmask 1041408
    %v312 = vrot.slane %v307, 6
    %v313 = vrot.slane %v308, 6
    %v314 = vsel %vm311, %v312, %v313
    %v316 = vsel %vm273, %v314, 0.0
    %v317 = vrot.slane %v316, 4
    %v318 = vadd.f32 %v316, %v317
    %v319 = vrot.slane %v318, 2
    %v320 = vadd.f32 %v318, %v319
    %v321 = vrot.slane %v320, 1
    %v322 = vadd.f32 %v320, %v321
    %s323 = scvt.s32.f32 %s300
    %v324 = vstv %s323
    %v325 = vrcp.pop %v324
    %v326 = vmul.f32 %v324, %v325
    %v327 = vsub.f32 1.0, %v326
    %v328 = vmul.f32 %v325, %v327
    %v329 = vadd.f32 %v325, %v328
    %vm330 = vweird.f32 %v324
    %vm331 = vweird.f32 %v325
    %vm332 = vmor %vm330, %vm331
    %v333 = vsel %vm332, %v325, %v329
    %v334 = vand.u32 2147483647, %v324
    %vm335 = vcmp.eq.f32.partialorder %v334, 8.507059e+37
    %v336 = vand.u32 %v324, 2147483648
    %v337 = vor.u32 1.1754944e-38, %v336
    %v338 = vsel %vm335, %v337, %v333
    %s339 = vtos %v338
    %v340 = vstv %s339
    %v341 = vmul.f32 %v322, %v340
    %vm342 = vcmask 1040384
    %v343 = vsel %vm342, %v299, %v341
    %v344 = vperm.slane %v229, 0
    %v345 = vadd.f32 %v343, %v344
    %vm346 = vcmask 123904
    %347 = vst.msk [vmem:[#allocation7] sm:$0x3] %vm346, %v345
    // Predicated region
    $region26: #{linear_regression_forward.1} parent=1 // pred_check
      _
    $region27: #{linear_regression_forward.1} parent=1 // pred_check_branch
      %349 = sbr.rel (0) target = $region29
    $region28: #{linear_regression_forward.1} parent=1 // pred_region
      %351 = vsyncadd [#allocation4], 0
      %s353 = sshll.u32 [#allocation7], 4
      %s354 = int_to_ptr.vmem [resolvable:$true] %s353
      %s355 = sshll.u32 %s4, 4
      %s356 = int_to_ptr.hbm [resolvable:$true] %s355
      %358 = dma.vmem_to_hbm [thread:$0]  %s354, 32, %s356, [#allocation4]
    $region29: #{linear_regression_forward.1} parent=1 // pred_fallthru
      _
    // Predicated region
    $region30: #{linear_regression_forward.1} parent=1 // pred_check
      _
    $region31: #{linear_regression_forward.1} parent=1 // pred_check_branch
      %360 = sbr.rel (0) target = $region33
    $region32: #{linear_regression_forward.1} parent=1 // pred_region
      %362 = dma.done [#allocation4], 32
    $region33: #{linear_regression_forward.1} parent=1 // pred_fallthru
      _
    %363 = vsyncpa [#allocation3], 1
    %364 = vsyncpa [#allocation4], 1
    %365 = vsyncpa [#allocation5], 1

</llo_original>
